<compile_context>
chip_gen: v5e
topology: v5e:2x2
jax: 0.10.0
libtpu: 0.0.40
codegen_flags: <defaults>
</compile_context>

<pallas_src>
import functools

import numpy as np
import jax
import jax.numpy as jnp
from jax import lax
from jax.experimental import pallas as pl
from jax.experimental.pallas import tpu as pltpu

EPS = 1e-5  # nn.BatchNorm2d default eps


def convblock_kernel(lhs1_ref, w1_ref, gamma_ref, beta_ref,
                     w2_ref, b2_ref, fold_ref, unfold_ref, o_ref,
                     *, n_batch, height):
    """Fused Convblock forward.

    lhs1_ref  : (N*H, 3*(W+2)*Cin) bf16  ky-merged im2row of the padded input
    w1_ref    : (3*(W+2)*Cin, W*Cout) bf16  ky-concatenated banded conv1 weights
    gamma_ref : (1, Cout) f32
    beta_ref  : (1, Cout) f32
    w2_ref    : (3*W*Cout, 128) bf16  ky-concatenated banded conv2 weights,
                output dim zero-padded from Wo*Cout to 128 (lane-dense store)
    b2_ref    : (1, 128) f32  conv2 bias tiled over x, zero-padded to 128
    fold_ref  : (W*Cout, Cout) f32  0/1 matrix: lane (x*C+c) -> channel c
    unfold_ref: (Cout, W*Cout) f32  transpose of fold
    o_ref     : (N*Ho, 128) f32  output, (Wo, Cout) lane-merged + zero pad
    """
    WC = w1_ref.shape[1]                 # W * Cout (128 -> lane dense)
    Cout = gamma_ref.shape[1]
    W = WC // Cout
    N, H = n_batch, height
    Ho = H - 2

    # ---- conv1 (pad=1): ONE banded matmul, ky merged into K ----------------
    # Conv1 bias omitted: with batch-statistics BN it cancels exactly.
    acc1 = jnp.dot(lhs1_ref[...], w1_ref[...],
                   preferred_element_type=jnp.float32)            # (N*H, WC) f32

    # ---- BatchNorm2d (training-mode batch stats), single pass --------------
    # Lane sums -> per-channel sums with ONE tiny 0/1 matmul (no strided
    # relayout); (scale, shift) expanded back to lanes with ONE matmul.
    inv_m = 1.0 / float(N * H * W)
    s = jnp.sum(acc1, axis=0, keepdims=True)                      # (1, WC)
    ss = jnp.sum(acc1 * acc1, axis=0, keepdims=True)              # (1, WC)
    stats_c = jnp.dot(jnp.concatenate([s, ss], axis=0), fold_ref[...],
                      preferred_element_type=jnp.float32)         # (2, Cout)
    mean_c = stats_c[0:1, :] * inv_m
    var_c = jnp.maximum(stats_c[1:2, :] * inv_m - mean_c * mean_c, 0.0)
    inv_std = lax.rsqrt(var_c + EPS)
    scale_c = gamma_ref[...] * inv_std                            # (1, Cout)
    shift_c = beta_ref[...] - mean_c * scale_c                    # (1, Cout)
    affine_l = jnp.dot(jnp.concatenate([scale_c, shift_c], axis=0),
                       unfold_ref[...],
                       preferred_element_type=jnp.float32)        # (2, WC)

    # ---- BN affine + ReLU; single bf16 cast of the activation --------------
    y1 = jnp.maximum(acc1 * affine_l[0:1, :] + affine_l[1:2, :],
                     0.0).astype(jnp.bfloat16)                    # (N*H, WC)

    # ---- conv2 (valid) + ReLU: ONE matmul, ONE lane-dense store ------------
    # Build (N*Ho, 3*WC) LHS: rows h, h+1, h+2 of y1 go into three
    # 128-lane-aligned column blocks (cheap lane-aligned copies).
    parts = []
    for n in range(N):                                            # static unroll
        b = n * H
        parts.append(jnp.concatenate(
            [y1[b:b + Ho, :], y1[b + 1:b + 1 + Ho, :], y1[b + 2:b + 2 + Ho, :]],
            axis=-1))                                             # (Ho, 3*WC)
    lhs2 = jnp.concatenate(parts, axis=0)                         # (N*Ho, 3*WC)
    acc2 = jnp.dot(lhs2, w2_ref[...],
                   preferred_element_type=jnp.float32)            # (N*Ho, 128)
    o_ref[...] = jnp.maximum(acc2 + b2_ref[...], 0.0)             # full 128-lane store


def _banded_weights(w_hwio, in_width, out_width):
    """(3,3,Cin,Cout) HWIO -> (3, in_width*Cin, out_width*Cout) block-Toeplitz
    matrices (one per kernel row ky): a 3x3 conv along width becomes a single
    lane-merged matmul per ky."""
    _, _, cin, cout = w_hwio.shape
    sel = np.zeros((in_width, 3, out_width), np.float32)
    for x in range(out_width):
        for kx in range(3):
            sel[x + kx, kx, x] = 1.0
    wb = jnp.einsum('jkx,gkio->gjixo', jnp.asarray(sel), w_hwio)
    return wb.reshape(3, in_width * cin, out_width * cout)


def convblock_forward(x_nchw, w1, b1, gamma, beta, w2, b2):
    """Forward pass of Convblock. Input/output are NCHW like PyTorch.

    `b1` is accepted for API parity but unused: with training-mode
    (batch-statistics) BatchNorm the conv1 bias cancels exactly.  If an
    eval/running-stats BN path were added, the bias add must be restored.
    """
    N, Cin, H, W = x_nchw.shape
    Cout = w1.shape[0]
    Ho, Wo = H - 2, W - 2
    K1 = (W + 2) * Cin                 # 72
    WC = W * Cout                      # 128
    WOC = Wo * Cout                    # 112
    WOC_PAD = ((WOC + 127) // 128) * 128   # 128 -> lane-dense output

    # NCHW -> NHWC, zero-pad H/W by 1, merge (W+2, Cin) onto lanes, cast bf16
    # ONCE, and build the ky-merged im2row LHS (pure layout plumbing; fuses
    # with the mandatory boundary transpose/pad in XLA).
    x = jnp.transpose(x_nchw, (0, 2, 3, 1)).astype(jnp.float32)
    xp = jnp.pad(x, ((0, 0), (1, 1), (1, 1), (0, 0)))
    xp2d = xp.reshape(N, H + 2, K1).astype(jnp.bfloat16)
    lhs1 = jnp.concatenate([xp2d[:, ky:ky + H, :] for ky in range(3)],
                           axis=-1).reshape(N * H, 3 * K1)        # (N*H, 216)

    # PyTorch OIHW -> HWIO -> banded, ky concatenated along K, bf16.
    w1_t = jnp.transpose(w1, (2, 3, 1, 0))
    w2_t = jnp.transpose(w2, (2, 3, 1, 0))
    w1b = _banded_weights(w1_t, W + 2, W).reshape(3 * K1, WC).astype(jnp.bfloat16)
    w2b = _banded_weights(w2_t, W, Wo)                            # (3, WC, WOC)
    w2b = jnp.pad(w2b, ((0, 0), (0, 0), (0, WOC_PAD - WOC)))      # lane-dense out
    w2b = w2b.reshape(3 * WC, WOC_PAD).astype(jnp.bfloat16)       # (384, 128)

    b2t = jnp.pad(jnp.tile(b2.astype(jnp.float32), Wo),
                  (0, WOC_PAD - WOC)).reshape(1, WOC_PAD)
    gamma2 = gamma.reshape(1, Cout).astype(jnp.float32)
    beta2 = beta.reshape(1, Cout).astype(jnp.float32)
    fold = jnp.asarray(np.tile(np.eye(Cout, dtype=np.float32), (W, 1)))    # (WC, Cout)
    unfold = jnp.asarray(np.tile(np.eye(Cout, dtype=np.float32), (1, W)))  # (Cout, WC)

    kernel = functools.partial(convblock_kernel, n_batch=N, height=H)
    out = pl.pallas_call(
        kernel,
        out_shape=jax.ShapeDtypeStruct((N * Ho, WOC_PAD), jnp.float32),
        in_specs=[pl.BlockSpec(memory_space=pltpu.MemorySpace.VMEM)] * 8,
        out_specs=pl.BlockSpec(memory_space=pltpu.MemorySpace.VMEM),
    )(lhs1, w1b, gamma2, beta2, w2b, b2t, fold, unfold)

    # Slice off lane padding, back to NCHW (fuses with the boundary transpose).
    out = out[:, :WOC].reshape(N, Ho, Wo, Cout)
    return jnp.transpose(out, (0, 3, 1, 2))


def convblock_reference(x_nchw, w1, b1, gamma, beta, w2, b2):
    """Pure-JAX reference (same bf16 operand rounding as the kernel)."""
    x = jnp.transpose(x_nchw, (0, 2, 3, 1)).astype(jnp.bfloat16)
    w1_t = jnp.transpose(w1, (2, 3, 1, 0)).astype(jnp.bfloat16)
    w2_t = jnp.transpose(w2, (2, 3, 1, 0)).astype(jnp.bfloat16)
    y = lax.conv_general_dilated(x, w1_t, (1, 1), ((1, 1), (1, 1)),
                                 dimension_numbers=('NHWC', 'HWIO', 'NHWC'),
                                 preferred_element_type=jnp.float32)
    y = y + b1.reshape(1, 1, 1, -1)
    mean = jnp.mean(y, axis=(0, 1, 2), keepdims=True)
    var = jnp.mean((y - mean) ** 2, axis=(0, 1, 2), keepdims=True)
    y = gamma.reshape(1, 1, 1, -1) * (y - mean) * lax.rsqrt(var + EPS) + beta.reshape(1, 1, 1, -1)
    y = jnp.maximum(y, 0.0).astype(jnp.bfloat16)
    z = lax.conv_general_dilated(y, w2_t, (1, 1), 'VALID',
                                 dimension_numbers=('NHWC', 'HWIO', 'NHWC'),
                                 preferred_element_type=jnp.float32)
    z = jnp.maximum(z + b2.reshape(1, 1, 1, -1), 0.0)
    return jnp.transpose(z, (0, 3, 1, 2))


if __name__ == "__main__":
    # Convblock(input_channel=4, output_channel=8), x: (2, 4, 16, 16) NCHW.
    key = jax.random.PRNGKey(0)
    k_x, k_w1, k_b1, k_w2, k_b2 = jax.random.split(key, 5)

    N, Cin, Cout, H, W = 2, 4, 8, 16, 16

    x = jax.random.normal(k_x, (N, Cin, H, W), jnp.float32)
    w1 = 0.1 * jax.random.normal(k_w1, (Cout, Cin, 3, 3), jnp.float32)
    b1 = 0.1 * jax.random.normal(k_b1, (Cout,), jnp.float32)
    gamma = jnp.ones((Cout,), jnp.float32)   # BatchNorm2d weight init
    beta = jnp.zeros((Cout,), jnp.float32)   # BatchNorm2d bias init
    w2 = 0.1 * jax.random.normal(k_w2, (Cout, Cout, 3, 3), jnp.float32)
    b2 = 0.1 * jax.random.normal(k_b2, (Cout,), jnp.float32)

    out = jax.jit(convblock_forward)(x, w1, b1, gamma, beta, w2, b2)
    out = jax.block_until_ready(out)

    ref = jax.jit(convblock_reference)(x, w1, b1, gamma, beta, w2, b2)
    ref = jax.block_until_ready(ref)

    assert out.shape == (N, Cout, H - 2, W - 2), out.shape
    assert bool(jnp.all(out >= 0.0))  # final ReLU
    err = float(jnp.max(jnp.abs(out - ref)))
    assert err < 5e-2, f"max |kernel - reference| = {err}"
    print("KERNEL_OK")
</pallas_src>

<mosaic_0001>
module attributes {stable_mosaic.version = 11 : i64} {
  func.func @convblock_kernel(%arg0: memref<32x216xbf16, #tpu.memory_space<vmem>>, %arg1: memref<216x128xbf16, #tpu.memory_space<vmem>>, %arg2: memref<1x8xf32, #tpu.memory_space<vmem>>, %arg3: memref<1x8xf32, #tpu.memory_space<vmem>>, %arg4: memref<384x128xbf16, #tpu.memory_space<vmem>>, %arg5: memref<1x128xf32, #tpu.memory_space<vmem>>, %arg6: memref<128x8xf32, #tpu.memory_space<vmem>>, %arg7: memref<8x128xf32, #tpu.memory_space<vmem>>, %arg8: memref<28x128xf32, #tpu.memory_space<vmem>>) attributes {dimension_semantics = [], scalar_prefetch = 0 : i64, scratch_operands = 0 : i64, tpu.core_type = #tpu.core_type<tc>} {
    %c0 = arith.constant 0 : index
    %c0_0 = arith.constant 0 : index
    %0 = vector.load %arg0[%c0, %c0_0] : memref<32x216xbf16, #tpu.memory_space<vmem>>, vector<32x216xbf16>
    %c0_1 = arith.constant 0 : index
    %c0_2 = arith.constant 0 : index
    %1 = vector.load %arg1[%c0_1, %c0_2] : memref<216x128xbf16, #tpu.memory_space<vmem>>, vector<216x128xbf16>
    %cst = arith.constant dense<0.000000e+00> : vector<32x128xf32>
    %2 = tpu.matmul %0, %1, %cst {dimension_numbers = #tpu.dot_dimension_numbers<[1], [0], [0], [1], [0, 0, 1, 1], [], []>} : vector<32x216xbf16>, vector<216x128xbf16>, vector<32x128xf32> -> vector<32x128xf32>
    %cst_3 = arith.constant dense<0.000000e+00> : vector<128xf32>
    %3 = vector.multi_reduction <add>, %2, %cst_3 [0] : vector<32x128xf32> to vector<128xf32>
    %4 = vector.shape_cast %3 : vector<128xf32> to vector<1x128xf32>
    %5 = arith.mulf %2, %2 : vector<32x128xf32>
    %cst_4 = arith.constant dense<0.000000e+00> : vector<128xf32>
    %6 = vector.multi_reduction <add>, %5, %cst_4 [0] : vector<32x128xf32> to vector<128xf32>
    %7 = vector.shape_cast %6 : vector<128xf32> to vector<1x128xf32>
    %8 = tpu.concatenate %4, %7 in 0 : vector<1x128xf32>, vector<1x128xf32> -> vector<2x128xf32>
    %c0_5 = arith.constant 0 : index
    %c0_6 = arith.constant 0 : index
    %9 = vector.load %arg6[%c0_5, %c0_6] : memref<128x8xf32, #tpu.memory_space<vmem>>, vector<128x8xf32>
    %cst_7 = arith.constant dense<0.000000e+00> : vector<2x8xf32>
    %10 = tpu.matmul %8, %9, %cst_7 {dimension_numbers = #tpu.dot_dimension_numbers<[1], [0], [0], [1], [0, 0, 1, 1], [], []>} : vector<2x128xf32>, vector<128x8xf32>, vector<2x8xf32> -> vector<2x8xf32>
    %11 = vector.extract_strided_slice %10 {offsets = [0, 0], sizes = [1, 8], strides = [1, 1]} : vector<2x8xf32> to vector<1x8xf32>
    %cst_8 = arith.constant 0.001953125 : f32
    %12 = vector.broadcast %cst_8 : f32 to vector<1x8xf32>
    %13 = arith.mulf %11, %12 : vector<1x8xf32>
    %14 = vector.extract_strided_slice %10 {offsets = [1, 0], sizes = [1, 8], strides = [1, 1]} : vector<2x8xf32> to vector<1x8xf32>
    %cst_9 = arith.constant 0.001953125 : f32
    %15 = vector.broadcast %cst_9 : f32 to vector<1x8xf32>
    %16 = arith.mulf %14, %15 : vector<1x8xf32>
    %17 = arith.mulf %13, %13 : vector<1x8xf32>
    %18 = arith.subf %16, %17 : vector<1x8xf32>
    %cst_10 = arith.constant 0.000000e+00 : f32
    %19 = vector.broadcast %cst_10 : f32 to vector<1x8xf32>
    %20 = arith.maximumf %18, %19 : vector<1x8xf32>
    %cst_11 = arith.constant 9.99999974E-6 : f32
    %21 = vector.broadcast %cst_11 : f32 to vector<1x8xf32>
    %22 = arith.addf %20, %21 : vector<1x8xf32>
    %23 = math.rsqrt %22 : vector<1x8xf32>
    %c0_12 = arith.constant 0 : index
    %c0_13 = arith.constant 0 : index
    %24 = vector.load %arg2[%c0_12, %c0_13] : memref<1x8xf32, #tpu.memory_space<vmem>>, vector<1x8xf32>
    %25 = arith.mulf %24, %23 : vector<1x8xf32>
    %c0_14 = arith.constant 0 : index
    %c0_15 = arith.constant 0 : index
    %26 = vector.load %arg3[%c0_14, %c0_15] : memref<1x8xf32, #tpu.memory_space<vmem>>, vector<1x8xf32>
    %27 = arith.mulf %13, %25 : vector<1x8xf32>
    %28 = arith.subf %26, %27 : vector<1x8xf32>
    %29 = tpu.concatenate %25, %28 in 0 : vector<1x8xf32>, vector<1x8xf32> -> vector<2x8xf32>
    %c0_16 = arith.constant 0 : index
    %c0_17 = arith.constant 0 : index
    %30 = vector.load %arg7[%c0_16, %c0_17] : memref<8x128xf32, #tpu.memory_space<vmem>>, vector<8x128xf32>
    %cst_18 = arith.constant dense<0.000000e+00> : vector<2x128xf32>
    %31 = tpu.matmul %29, %30, %cst_18 {dimension_numbers = #tpu.dot_dimension_numbers<[1], [0], [0], [1], [0, 0, 1, 1], [], []>} : vector<2x8xf32>, vector<8x128xf32>, vector<2x128xf32> -> vector<2x128xf32>
    %32 = vector.extract_strided_slice %31 {offsets = [0, 0], sizes = [1, 128], strides = [1, 1]} : vector<2x128xf32> to vector<1x128xf32>
    %33 = vector.broadcast %32 : vector<1x128xf32> to vector<32x128xf32>
    %34 = arith.mulf %2, %33 : vector<32x128xf32>
    %35 = vector.extract_strided_slice %31 {offsets = [1, 0], sizes = [1, 128], strides = [1, 1]} : vector<2x128xf32> to vector<1x128xf32>
    %36 = vector.broadcast %35 : vector<1x128xf32> to vector<32x128xf32>
    %37 = arith.addf %34, %36 : vector<32x128xf32>
    %cst_19 = arith.constant 0.000000e+00 : f32
    %38 = vector.broadcast %cst_19 : f32 to vector<32x128xf32>
    %39 = arith.maximumf %37, %38 : vector<32x128xf32>
    %40 = arith.truncf %39 : vector<32x128xf32> to vector<32x128xbf16>
    %41 = vector.extract_strided_slice %40 {offsets = [0, 0], sizes = [14, 128], strides = [1, 1]} : vector<32x128xbf16> to vector<14x128xbf16>
    %42 = vector.extract_strided_slice %40 {offsets = [1, 0], sizes = [14, 128], strides = [1, 1]} : vector<32x128xbf16> to vector<14x128xbf16>
    %43 = vector.extract_strided_slice %40 {offsets = [2, 0], sizes = [14, 128], strides = [1, 1]} : vector<32x128xbf16> to vector<14x128xbf16>
    %44 = tpu.concatenate %41, %42, %43 in 1 : vector<14x128xbf16>, vector<14x128xbf16>, vector<14x128xbf16> -> vector<14x384xbf16>
    %45 = vector.extract_strided_slice %40 {offsets = [16, 0], sizes = [14, 128], strides = [1, 1]} : vector<32x128xbf16> to vector<14x128xbf16>
    %46 = vector.extract_strided_slice %40 {offsets = [17, 0], sizes = [14, 128], strides = [1, 1]} : vector<32x128xbf16> to vector<14x128xbf16>
    %47 = vector.extract_strided_slice %40 {offsets = [18, 0], sizes = [14, 128], strides = [1, 1]} : vector<32x128xbf16> to vector<14x128xbf16>
    %48 = tpu.concatenate %45, %46, %47 in 1 : vector<14x128xbf16>, vector<14x128xbf16>, vector<14x128xbf16> -> vector<14x384xbf16>
    %49 = tpu.concatenate %44, %48 in 0 : vector<14x384xbf16>, vector<14x384xbf16> -> vector<28x384xbf16>
    %c0_20 = arith.constant 0 : index
    %c0_21 = arith.constant 0 : index
    %50 = vector.load %arg4[%c0_20, %c0_21] : memref<384x128xbf16, #tpu.memory_space<vmem>>, vector<384x128xbf16>
    %cst_22 = arith.constant dense<0.000000e+00> : vector<28x128xf32>
    %51 = tpu.matmul %49, %50, %cst_22 {dimension_numbers = #tpu.dot_dimension_numbers<[1], [0], [0], [1], [0, 0, 1, 1], [], []>} : vector<28x384xbf16>, vector<384x128xbf16>, vector<28x128xf32> -> vector<28x128xf32>
    %c0_23 = arith.constant 0 : index
    %c0_24 = arith.constant 0 : index
    %52 = vector.load %arg5[%c0_23, %c0_24] : memref<1x128xf32, #tpu.memory_space<vmem>>, vector<1x128xf32>
    %53 = vector.broadcast %52 : vector<1x128xf32> to vector<28x128xf32>
    %54 = arith.addf %51, %53 : vector<28x128xf32>
    %cst_25 = arith.constant 0.000000e+00 : f32
    %55 = vector.broadcast %cst_25 : f32 to vector<28x128xf32>
    %56 = arith.maximumf %54, %55 : vector<28x128xf32>
    %c0_26 = arith.constant 0 : index
    %c0_27 = arith.constant 0 : index
    %57 = vector.load %arg8[%c0_26, %c0_27] : memref<28x128xf32, #tpu.memory_space<vmem>>, vector<28x128xf32>
    tpu.vector_store %arg8[%c0_26, %c0_27], %56 {strides = array<i32>} : memref<28x128xf32, #tpu.memory_space<vmem>>, vector<28x128xf32>,
    return
  }
}

</mosaic_0001>

<llo_original>
// kernel: tile.8
$region0: #{tile.8}
  #allocation0 [shape = 's32[1]{0}', space=sflag, size = 0x4, scoped, tag = 'scoped memory for tile.8']
  %s0 = inlined_call_operand.vmem [shape: f32[8], index: 0, kind: input, shape index: {}]
  %s1 = inlined_call_operand.vmem [shape: f32[14,8], index: 1, kind: output, shape index: {}]
  // Predicated region
  $region2: #{tile.8} parent=0 // pred_check
    _
  $region3: #{tile.8} parent=0 // pred_check_branch
    %3 = sbr.rel (0) target = $region5
  $region4: #{tile.8} parent=0 // pred_region
    _
  $region5: #{tile.8} parent=0 // pred_fallthru
    _
  %v4 = vld [vmem:[%s0] ss:$0 sm:$0xff]
  %5 = vst [vmem:[%s1] sm:$0xff] %v4
  %s6 = scalar_lea.vmem %s1, 8
  %7 = vst [vmem:[%s6] sm:$0xff] %v4

// kernel: tile.9
$region0: #{tile.9}
  %s0 = inlined_call_operand.vmem [shape: f32[14,8], index: 0, kind: input, shape index: {}]
  %s1 = inlined_call_operand.vmem [shape: f32[112], index: 1, kind: output, shape index: {}]
  $region1: #{tile.9} parent=0
    #allocation0 [shape = 'u8[4096]{0}', space=vmem, size = 0x1000, scoped, tag = 'scoped mem for output reshape']
    %v2 = vld [vmem:[%s0] sm:$0x1]
    %vm3 = vcmask 64512
    %4 = vst.msk [vmem:[#allocation0] sm:$0x1] %vm3, %v2
    %s5 = scalar_lea.vmem %s0, 13
    %v6 = vld [vmem:[%s5] sm:$0x1]
    %7 = vrot.lane.b32.xlu0 %v6, 104
    %v8 = vpop.permute.xlu0 %7
    %vm9 = vcmask 917312
    %10 = vst.msk [vmem:[#allocation0] sm:$0x1] %vm9, %v8
    %s11 = scalar_lea.vmem %s0, 12
    %v12 = vld [vmem:[%s11] sm:$0x1]
    %13 = vrot.lane.b32.xlu0 %v12, 96
    %v14 = vpop.permute.xlu0 %13
    %vm15 = vcmask 851712
    %16 = vst.msk [vmem:[#allocation0] sm:$0x1] %vm15, %v14
    %s17 = scalar_lea.vmem %s0, 11
    %v18 = vld [vmem:[%s17] sm:$0x1]
    %19 = vrot.lane.b32.xlu0 %v18, 88
    %v20 = vpop.permute.xlu0 %19
    %vm21 = vcmask 786112
    %22 = vst.msk [vmem:[#allocation0] sm:$0x1] %vm21, %v20
    %s23 = scalar_lea.vmem %s0, 10
    %v24 = vld [vmem:[%s23] sm:$0x1]
    %25 = vrot.lane.b32.xlu0 %v24, 80
    %v26 = vpop.permute.xlu0 %25
    %vm27 = vcmask 720512
    %28 = vst.msk [vmem:[#allocation0] sm:$0x1] %vm27, %v26
    %s29 = scalar_lea.vmem %s0, 9
    %v30 = vld [vmem:[%s29] sm:$0x1]
    %31 = vrot.lane.b32.xlu0 %v30, 72
    %v32 = vpop.permute.xlu0 %31
    %vm33 = vcmask 654912
    %34 = vst.msk [vmem:[#allocation0] sm:$0x1] %vm33, %v32
    %s35 = scalar_lea.vmem %s0, 8
    %v36 = vld [vmem:[%s35] sm:$0x1]
    %37 = vrot.lane.b32.xlu0 %v36, 64
    %v38 = vpop.permute.xlu0 %37
    %vm39 = vcmask 589312
    %40 = vst.msk [vmem:[#allocation0] sm:$0x1] %vm39, %v38
    %s41 = scalar_lea.vmem %s0, 7
    %v42 = vld [vmem:[%s41] sm:$0x1]
    %43 = vrot.lane.b32.xlu0 %v42, 56
    %v44 = vpop.permute.xlu0 %43
    %vm45 = vcmask 523712
    %46 = vst.msk [vmem:[#allocation0] sm:$0x1] %vm45, %v44
    %s47 = scalar_lea.vmem %s0, 6
    %v48 = vld [vmem:[%s47] sm:$0x1]
    %49 = vrot.lane.b32.xlu0 %v48, 48
    %v50 = vpop.permute.xlu0 %49
    %vm51 = vcmask 458112
    %52 = vst.msk [vmem:[#allocation0] sm:$0x1] %vm51, %v50
    %s53 = scalar_lea.vmem %s0, 5
    %v54 = vld [vmem:[%s53] sm:$0x1]
    %55 = vrot.lane.b32.xlu0 %v54, 40
    %v56 = vpop.permute.xlu0 %55
    %vm57 = vcmask 392512
    %58 = vst.msk [vmem:[#allocation0] sm:$0x1] %vm57, %v56
    %s59 = scalar_lea.vmem %s0, 4
    %v60 = vld [vmem:[%s59] sm:$0x1]
    %61 = vrot.lane.b32.xlu0 %v60, 32
    %v62 = vpop.permute.xlu0 %61
    %vm63 = vcmask 326912
    %64 = vst.msk [vmem:[#allocation0] sm:$0x1] %vm63, %v62
    %s65 = scalar_lea.vmem %s0, 3
    %v66 = vld [vmem:[%s65] sm:$0x1]
    %67 = vrot.lane.b32.xlu0 %v66, 24
    %v68 = vpop.permute.xlu0 %67
    %vm69 = vcmask 261312
    %70 = vst.msk [vmem:[#allocation0] sm:$0x1] %vm69, %v68
    %s71 = scalar_lea.vmem %s0, 2
    %v72 = vld [vmem:[%s71] sm:$0x1]
    %73 = vrot.lane.b32.xlu0 %v72, 16
    %v74 = vpop.permute.xlu0 %73
    %vm75 = vcmask 195712
    %76 = vst.msk [vmem:[#allocation0] sm:$0x1] %vm75, %v74
    %s77 = scalar_lea.vmem %s0, 1
    %v78 = vld [vmem:[%s77] sm:$0x1]
    %79 = vrot.lane.b32.xlu0 %v78, 8
    %v80 = vpop.permute.xlu0 %79
    %vm81 = vcmask 130112
    %82 = vst.msk [vmem:[#allocation0] sm:$0x1] %vm81, %v80
    %s84 = ssub.s32 2, 1
    %v85 = vld [vmem:[#allocation0] sm:%s84]
    %s87 = ssub.s32 2, 1
    %88 = vst [vmem:[%s1] sm:%s87] %v85

// kernel: convblock_forward.1
$region0: #{convblock_forward.1}
  #allocation0 [shape = 'u32[]', space=smem, size = 0x4, offset = 0x4, fixed_abs, tag = 'smem constant byte address 0x4 - core index']
  #allocation1 [shape = 'u32[72,128]{1,0:T(1,128)}', space=vmem, size = 0x9000, scoped, tag = 'internal scratch']
  %s0 = inlined_call_operand.vmem [shape: bf16[32,216], index: 0, kind: input, shape index: {}]
  %s1 = inlined_call_operand.vmem [shape: bf16[216,128], index: 1, kind: input, shape index: {}]
  %s2 = inlined_call_operand.vmem [shape: f32[1,8], index: 2, kind: input, shape index: {}]
  %s3 = inlined_call_operand.vmem [shape: f32[1,8], index: 3, kind: input, shape index: {}]
  %s4 = inlined_call_operand.vmem [shape: bf16[384,128], index: 4, kind: input, shape index: {}]
  %s5 = inlined_call_operand.vmem [shape: f32[1,128], index: 5, kind: input, shape index: {}]
  %s6 = inlined_call_operand.vmem [shape: f32[128,8], index: 6, kind: input, shape index: {}]
  %s7 = inlined_call_operand.vmem [shape: f32[8,128], index: 7, kind: input, shape index: {}]
  %s8 = inlined_call_operand.vmem [shape: f32[28,128], index: 8, kind: output, shape index: {}]
  %s9 = sld [smem:[#allocation0]]
  $region42: #{convblock_forward.1} parent=0
    _
  %s11 = ssub.s32 1, %s9
  %s12 = scalar_select 0, %s11, %s9
  // Predicated region
  $region2: #{convblock_forward.1} parent=0 // pred_check
    _
  $region3: #{convblock_forward.1} parent=0 // pred_check_branch
    %14 = sbr.rel (0) target = $region5
  $region4: #{convblock_forward.1} parent=0 // pred_region
    _
  $region5: #{convblock_forward.1} parent=0 // pred_fallthru
    _
  // Predicated region
  $region6: #{convblock_forward.1} parent=0 // pred_check
    _
  $region7: #{convblock_forward.1} parent=0 // pred_check_branch
    %16 = sbr.rel (0) target = $region9
  $region8: #{convblock_forward.1} parent=0 // pred_region
    _
  $region9: #{convblock_forward.1} parent=0 // pred_fallthru
    _
  // Predicated region
  $region10: #{convblock_forward.1} parent=0 // pred_check
    _
  $region11: #{convblock_forward.1} parent=0 // pred_check_branch
    %18 = sbr.rel (0) target = $region13
  $region12: #{convblock_forward.1} parent=0 // pred_region
    _
  $region13: #{convblock_forward.1} parent=0 // pred_fallthru
    _
  // Predicated region
  $region14: #{convblock_forward.1} parent=0 // pred_check
    _
  $region15: #{convblock_forward.1} parent=0 // pred_check_branch
    %20 = sbr.rel (0) target = $region17
  $region16: #{convblock_forward.1} parent=0 // pred_region
    _
  $region17: #{convblock_forward.1} parent=0 // pred_fallthru
    _
  // Predicated region
  $region18: #{convblock_forward.1} parent=0 // pred_check
    _
  $region19: #{convblock_forward.1} parent=0 // pred_check_branch
    %22 = sbr.rel (0) target = $region21
  $region20: #{convblock_forward.1} parent=0 // pred_region
    _
  $region21: #{convblock_forward.1} parent=0 // pred_fallthru
    _
  // Predicated region
  $region22: #{convblock_forward.1} parent=0 // pred_check
    _
  $region23: #{convblock_forward.1} parent=0 // pred_check_branch
    %24 = sbr.rel (0) target = $region25
  $region24: #{convblock_forward.1} parent=0 // pred_region
    _
  $region25: #{convblock_forward.1} parent=0 // pred_fallthru
    _
  // Predicated region
  $region26: #{convblock_forward.1} parent=0 // pred_check
    _
  $region27: #{convblock_forward.1} parent=0 // pred_check_branch
    %26 = sbr.rel (0) target = $region29
  $region28: #{convblock_forward.1} parent=0 // pred_region
    _
  $region29: #{convblock_forward.1} parent=0 // pred_fallthru
    _
  // Predicated region
  $region30: #{convblock_forward.1} parent=0 // pred_check
    _
  $region31: #{convblock_forward.1} parent=0 // pred_check_branch
    %28 = sbr.rel (0) target = $region33
  $region32: #{convblock_forward.1} parent=0 // pred_region
    _
  $region33: #{convblock_forward.1} parent=0 // pred_fallthru
    _
  %v30 = vld [vmem:[%s0] sm:$0xff]
  %v31 = vld [vmem:[%s0 + $0x8] sm:$0xff]
  %v32 = vld [vmem:[%s0 + $0x10] sm:$0xff]
  %v33 = vld [vmem:[%s0 + $0x18] sm:$0xff]
  %v34 = vld [vmem:[%s1] sm:$0xf]
  %v35 = vld [vmem:[%s1 + $0x4] sm:$0xf]
  %v36 = vld [vmem:[%s1 + $0x8] sm:$0xf]
  %v37 = vld [vmem:[%s1 + $0xc] sm:$0xf]
  %v38 = vld [vmem:[%s1 + $0x10] sm:$0xf]
  %v39 = vld [vmem:[%s1 + $0x14] sm:$0xf]
  %v40 = vld [vmem:[%s1 + $0x18] sm:$0xf]
  %v41 = vld [vmem:[%s1 + $0x1c] sm:$0xf]
  %v42 = vld [vmem:[%s1 + $0x20] sm:$0xf]
  %v43 = vld [vmem:[%s1 + $0x24] sm:$0xf]
  %v44 = vld [vmem:[%s1 + $0x28] sm:$0xf]
  %v45 = vld [vmem:[%s1 + $0x2c] sm:$0xf]
  %v46 = vld [vmem:[%s1 + $0x30] sm:$0xf]
  %v47 = vld [vmem:[%s1 + $0x34] sm:$0xf]
  %v48 = vld [vmem:[%s1 + $0x38] sm:$0xf]
  %v49 = vld [vmem:[%s1 + $0x3c] sm:$0xf]
  %v50 = vld [vmem:[%s1 + $0x40] sm:$0xf]
  %v51 = vld [vmem:[%s1 + $0x44] sm:$0xf]
  %v52 = vld [vmem:[%s1 + $0x48] sm:$0xf]
  %v53 = vld [vmem:[%s1 + $0x4c] sm:$0xf]
  %v54 = vld [vmem:[%s1 + $0x50] sm:$0xf]
  %v55 = vld [vmem:[%s1 + $0x54] sm:$0xf]
  %v56 = vld [vmem:[%s1 + $0x58] sm:$0xf]
  %v57 = vld [vmem:[%s1 + $0x5c] sm:$0xf]
  %v58 = vld [vmem:[%s1 + $0x60] sm:$0xf]
  %v59 = vld [vmem:[%s1 + $0x64] sm:$0xf]
  %v60 = vld [vmem:[%s1 + $0x68] sm:$0xf]
  %v65 = vunpack.c.l.b16 %v30
  %v66 = vunpack.c.h.b16 %v30
  %v67 = vunpack.c.l.b16 %v31
  %v68 = vunpack.c.h.b16 %v31
  %v69 = vunpack.c.l.b16 %v32
  %v70 = vunpack.c.h.b16 %v32
  %v71 = vunpack.c.l.b16 %v33
  %v72 = vunpack.c.h.b16 %v33
  %v73 = vpack.c.b16 %v67, %v65
  %v74 = vpack.c.b16 %v68, %v66
  %v75 = vpack.c.b16 %v71, %v69
  %v76 = vpack.c.b16 %v72, %v70
  %v106 = vunpack.c.l.b16 %v34
  %v107 = vunpack.c.l.b16 %v35
  %v108 = vunpack.c.l.b16 %v36
  %v109 = vunpack.c.l.b16 %v37
  %v110 = vunpack.c.l.b16 %v38
  %v111 = vunpack.c.l.b16 %v39
  %v112 = vunpack.c.l.b16 %v40
  %v113 = vunpack.c.l.b16 %v41
  %v114 = vunpack.c.l.b16 %v42
  %v115 = vunpack.c.l.b16 %v43
  %v116 = vunpack.c.l.b16 %v44
  %v117 = vunpack.c.l.b16 %v45
  %v118 = vunpack.c.l.b16 %v46
  %v119 = vunpack.c.l.b16 %v47
  %v120 = vunpack.c.l.b16 %v48
  %v121 = vunpack.c.l.b16 %v49
  %v122 = vunpack.c.l.b16 %v50
  %v123 = vunpack.c.l.b16 %v51
  %v124 = vunpack.c.l.b16 %v52
  %v125 = vunpack.c.l.b16 %v53
  %v126 = vunpack.c.l.b16 %v54
  %v127 = vunpack.c.l.b16 %v55
  %v128 = vunpack.c.l.b16 %v56
  %v129 = vunpack.c.l.b16 %v57
  %v130 = vunpack.c.l.b16 %v58
  %v131 = vunpack.c.l.b16 %v59
  %v132 = vunpack.c.l.b16 %v60
  %v133 = vpack.c.b16 %v107, %v106
  %v134 = vpack.c.b16 %v109, %v108
  %v135 = vpack.c.b16 %v111, %v110
  %v136 = vpack.c.b16 %v113, %v112
  %v137 = vpack.c.b16 %v115, %v114
  %v138 = vpack.c.b16 %v117, %v116
  %v139 = vpack.c.b16 %v119, %v118
  %v140 = vpack.c.b16 %v121, %v120
  %v141 = vpack.c.b16 %v123, %v122
  %v142 = vpack.c.b16 %v125, %v124
  %v143 = vpack.c.b16 %v127, %v126
  %v144 = vpack.c.b16 %v129, %v128
  %v145 = vpack.c.b16 %v131, %v130
  %v146 = vpack.c.b16 %v132, %v132
  %vm160 = vcmask 719872
  %v162 = vsel %vm160, %v74, 0
  %v165 = vsel %vm160, %v76, 0
  %vm167 = vcmask 1043456
  %v169 = vsel %vm167, %v146, 0
  %171 = vmatpush.bf16.msra.mxu0 %v140
  %172 = vmatpush.bf16.msra.mxu0 %v139
  %173 = vmatpush.bf16.msra.mxu0 %v138
  %174 = vmatpush.bf16.msra.mxu0 %v137
  %175 = vmatpush.bf16.msra.mxu0 %v136
  %176 = vmatpush.bf16.msra.mxu0 %v135
  %177 = vmatpush.bf16.msra.mxu0 %v134
  %178 = vmatpush.bf16.msra.mxu0 %v133
  %179 = vmatmul.bf16.gmra.mxu0 %v73
  %v180 = vpop.f32.mrf.mxu0
  %v181 = vadd.f32 0.0, %v180
  %v182 = vpop.f32.mrf.mxu0
  %v183 = vadd.f32 0.0, %v182
  %184 = vmatmul.bf16.gmra.mxu0 %v75
  %v185 = vpop.f32.mrf.mxu0
  %v186 = vadd.f32 0.0, %v185
  %v187 = vpop.f32.mrf.mxu0
  %v188 = vadd.f32 0.0, %v187
  %189 = vdwg.mxu0
  %190 = vmatpush.bf16.msra.mxu0 0
  %191 = vmatpush.bf16.msra.mxu0 0
  %192 = vmatpush.bf16.msra.mxu0 %v169
  %193 = vmatpush.bf16.msra.mxu0 %v145
  %194 = vmatpush.bf16.msra.mxu0 %v144
  %195 = vmatpush.bf16.msra.mxu0 %v143
  %196 = vmatpush.bf16.msra.mxu0 %v142
  %197 = vmatpush.bf16.msra.mxu0 %v141
  %198 = vmatmul.bf16.gmra.mxu0 %v162
  %v199 = vpop.f32.mrf.mxu0
  %v200 = vadd.f32 %v181, %v199
  %v201 = vpop.f32.mrf.mxu0
  %v202 = vadd.f32 %v183, %v201
  %203 = vmatmul.bf16.gmra.mxu0 %v165
  %v204 = vpop.f32.mrf.mxu0
  %v205 = vadd.f32 %v186, %v204
  %v206 = vpop.f32.mrf.mxu0
  %v207 = vadd.f32 %v188, %v206
  %208 = vdwg.mxu0
  %v209 = vadd.f32 %v200, %v202
  %v210 = vadd.f32 %v209, %v205
  %v211 = vadd.f32 %v210, %v207
  %v212 = vrot.slane %v211, 4
  %v213 = vadd.f32 %v211, %v212
  %v214 = vrot.slane %v213, 2
  %v215 = vadd.f32 %v213, %v214
  %v216 = vrot.slane %v215, 1
  %v217 = vadd.f32 %v215, %v216
  %v218 = vmul.f32 %v200, %v200
  %v219 = vmul.f32 %v202, %v202
  %v220 = vmul.f32 %v205, %v205
  %v221 = vmul.f32 %v207, %v207
  %v222 = vadd.f32 %v218, %v219
  %v223 = vadd.f32 %v222, %v220
  %v224 = vadd.f32 %v223, %v221
  %v225 = vrot.slane %v224, 4
  %v226 = vadd.f32 %v224, %v225
  %v227 = vrot.slane %v226, 2
  %v228 = vadd.f32 %v226, %v227
  %v229 = vrot.slane %v228, 1
  %v230 = vadd.f32 %v228, %v229
  %vm231 = vcmask 1040384
  %v232 = vsel %vm231, %v217, %v230
  %v233 = vld [vmem:[%s6] sm:$0xff]
  %v234 = vld [vmem:[%s6 + $0x8] sm:$0xff]
  %v235 = vld [vmem:[%s6 + $0x10] sm:$0xff]
  %v236 = vld [vmem:[%s6 + $0x18] sm:$0xff]
  %v237 = vld [vmem:[%s6 + $0x20] sm:$0xff]
  %v238 = vld [vmem:[%s6 + $0x28] sm:$0xff]
  %v239 = vld [vmem:[%s6 + $0x30] sm:$0xff]
  %v240 = vld [vmem:[%s6 + $0x38] sm:$0xff]
  %v241 = vld [vmem:[%s6 + $0x40] sm:$0xff]
  %v242 = vld [vmem:[%s6 + $0x48] sm:$0xff]
  %v243 = vld [vmem:[%s6 + $0x50] sm:$0xff]
  %v244 = vld [vmem:[%s6 + $0x58] sm:$0xff]
  %v245 = vld [vmem:[%s6 + $0x60] sm:$0xff]
  %v246 = vld [vmem:[%s6 + $0x68] sm:$0xff]
  %v247 = vld [vmem:[%s6 + $0x70] sm:$0xff]
  %v248 = vld [vmem:[%s6 + $0x78] sm:$0xff]
  %249 = vmatpush.msra.mxu0 %v248
  %250 = vmatpush.msra.mxu0 %v247
  %251 = vmatpush.msra.mxu0 %v246
  %252 = vmatpush.msra.mxu0 %v245
  %253 = vmatpush.msra.mxu0 %v244
  %254 = vmatpush.msra.mxu0 %v243
  %255 = vmatpush.msra.mxu0 %v242
  %256 = vmatpush.msra.mxu0 %v241
  %257 = vmatpush.msra.mxu0 %v240
  %258 = vmatpush.msra.mxu0 %v239
  %259 = vmatpush.msra.mxu0 %v238
  %260 = vmatpush.msra.mxu0 %v237
  %261 = vmatpush.msra.mxu0 %v236
  %262 = vmatpush.msra.mxu0 %v235
  %263 = vmatpush.msra.mxu0 %v234
  %264 = vmatpush.msra.mxu0 %v233
  %265 = vmatmul.f32.gmra.mxu0 %v232
  %v266 = vpop.f32.mrf.mxu0
  %v267 = vadd.f32 0.0, %v266
  %268 = vdwg.mxu0
  %v269 = vmul.f32 %v267, 0.001953125
  %v270 = vmul.f32 %v269, %v269
  %v272 = vrot.slane %v270, 7
  %v274 = vsub.f32 %v269, %v272
  %v275 = vmax.f32 %v274, 0.0
  %v276 = vadd.f32 %v275, 1e-05
  %v277 = vrsqrt.pop %v276
  %v278 = vmul.f32 %v277, %v276
  %v279 = vmul.f32 %v278, %v277
  %v280 = vmul.f32 0.5, %v279
  %v281 = vsub.f32 1.5, %v280
  %v282 = vmul.f32 %v277, %v281
  %vm283 = vweird.f32 %v276
  %vm284 = vweird.f32 %v277
  %vm285 = vmor %vm283, %vm284
  %v286 = vsel %vm285, %v277, %v282
  %v287 = vld [vmem:[%s2] sm:$0x1]
  %289 = vst [vmem:[#allocation1] sm:$0xff] %v286
  %s290 = scalar_lea.vmem [#allocation1], 1
  %v291 = vld [vmem:[%s290] ss:$9 sm:$0xff]
  %v293 = vmul.f32 %v287, %v291
  %v294 = vld [vmem:[%s3] sm:$0x1]
  %v295 = vmul.f32 %v269, %v293
  %v296 = vsub.f32 %v294, %v295
  %v298 = vperm.slane %v296, 0
  %v300 = vsel %vm231, %v293, %v298
  %v301 = vld [vmem:[%s7] sm:$0xff]
  %vm302 = vcmask 64512
  %v304 = vsel %vm302, %v300, 0
  %306 = vmatpush.msra.mxu0 0.0
  %307 = vmatpush.msra.mxu0 0.0
  %308 = vmatpush.msra.mxu0 0.0
  %309 = vmatpush.msra.mxu0 0.0
  %310 = vmatpush.msra.mxu0 0.0
  %311 = vmatpush.msra.mxu0 0.0
  %312 = vmatpush.msra.mxu0 0.0
  %313 = vmatpush.msra.mxu0 0.0
  %314 = vmatpush.msra.mxu0 0.0
  %315 = vmatpush.msra.mxu0 0.0
  %316 = vmatpush.msra.mxu0 0.0
  %317 = vmatpush.msra.mxu0 0.0
  %318 = vmatpush.msra.mxu0 0.0
  %319 = vmatpush.msra.mxu0 0.0
  %320 = vmatpush.msra.mxu0 0.0
  %321 = vmatpush.msra.mxu0 %v301
  %322 = vmatmul.f32.gmra.mxu0 %v304
  %v323 = vpop.f32.mrf.mxu0
  %v324 = vadd.f32 0.0, %v323
  %325 = vdwg.mxu0
  %v326 = vperm.slane %v324, 0
  %v327 = vmul.f32 %v200, %v326
  %v328 = vmul.f32 %v202, %v326
  %v329 = vmul.f32 %v205, %v326
  %v330 = vmul.f32 %v207, %v326
  %v331 = vperm.slane %v324, 1
  %v332 = vadd.f32 %v327, %v331
  %v333 = vadd.f32 %v328, %v331
  %v334 = vadd.f32 %v329, %v331
  %v335 = vadd.f32 %v330, %v331
  %v336 = vmax.f32 %v332, 0.0
  %v337 = vmax.f32 %v333, 0.0
  %v338 = vmax.f32 %v334, 0.0
  %v339 = vmax.f32 %v335, 0.0
  %v340 = vpack.c.bf16 %v336, %v336
  %v341 = vpack.c.bf16 %v337, %v337
  %v342 = vpack.c.bf16 %v338, %v338
  %v343 = vpack.c.bf16 %v339, %v339
  %v346 = vunpack.c.l.b16 %v340
  %v347 = vunpack.c.l.b16 %v341
  %v348 = vpack.c.b16 %v347, %v346
  %v350 = vshrl.u32 %v348, 16
  %v352 = vshll.u32 %v348, 16
  %v354 = vrot.slane %v352, 1
  %v355 = vor.u32 %v350, %v354
  %v356 = vrot.slane %v348, 1
  %v359 = vunpack.c.l.b16 %v342
  %v360 = vunpack.c.l.b16 %v343
  %v361 = vpack.c.b16 %v360, %v359
  %v363 = vshrl.u32 %v361, 16
  %v365 = vshll.u32 %v361, 16
  %v367 = vrot.slane %v365, 1
  %v368 = vor.u32 %v363, %v367
  %v369 = vrot.slane %v361, 1
  %v370 = vrot.slane %v368, 1
  %v371 = vrot.slane %v369, 1
  %vm375 = vcmask 1046528
  %v377 = vsel %vm375, %v348, %v369
  %v381 = vsel %vm375, %v355, %v370
  %v385 = vsel %vm375, %v356, %v371
  %v387 = vld [vmem:[%s4] sm:$0xf]
  %v388 = vld [vmem:[%s4 + $0x4] sm:$0xf]
  %v389 = vld [vmem:[%s4 + $0x8] sm:$0xf]
  %v390 = vld [vmem:[%s4 + $0xc] sm:$0xf]
  %v391 = vld [vmem:[%s4 + $0x10] sm:$0xf]
  %v392 = vld [vmem:[%s4 + $0x14] sm:$0xf]
  %v393 = vld [vmem:[%s4 + $0x18] sm:$0xf]
  %v394 = vld [vmem:[%s4 + $0x1c] sm:$0xf]
  %v395 = vld [vmem:[%s4 + $0x20] sm:$0xf]
  %v396 = vld [vmem:[%s4 + $0x24] sm:$0xf]
  %v397 = vld [vmem:[%s4 + $0x28] sm:$0xf]
  %v398 = vld [vmem:[%s4 + $0x2c] sm:$0xf]
  %v399 = vld [vmem:[%s4 + $0x30] sm:$0xf]
  %v400 = vld [vmem:[%s4 + $0x34] sm:$0xf]
  %v401 = vld [vmem:[%s4 + $0x38] sm:$0xf]
  %v402 = vld [vmem:[%s4 + $0x3c] sm:$0xf]
  %v403 = vld [vmem:[%s4 + $0x40] sm:$0xf]
  %v404 = vld [vmem:[%s4 + $0x44] sm:$0xf]
  %v405 = vld [vmem:[%s4 + $0x48] sm:$0xf]
  %v406 = vld [vmem:[%s4 + $0x4c] sm:$0xf]
  %v407 = vld [vmem:[%s4 + $0x50] sm:$0xf]
  %v408 = vld [vmem:[%s4 + $0x54] sm:$0xf]
  %v409 = vld [vmem:[%s4 + $0x58] sm:$0xf]
  %v410 = vld [vmem:[%s4 + $0x5c] sm:$0xf]
  %v411 = vld [vmem:[%s4 + $0x60] sm:$0xf]
  %v412 = vld [vmem:[%s4 + $0x64] sm:$0xf]
  %v413 = vld [vmem:[%s4 + $0x68] sm:$0xf]
  %v414 = vld [vmem:[%s4 + $0x6c] sm:$0xf]
  %v415 = vld [vmem:[%s4 + $0x70] sm:$0xf]
  %v416 = vld [vmem:[%s4 + $0x74] sm:$0xf]
  %v417 = vld [vmem:[%s4 + $0x78] sm:$0xf]
  %v418 = vld [vmem:[%s4 + $0x7c] sm:$0xf]
  %v419 = vld [vmem:[%s4 + $0x80] sm:$0xf]
  %v420 = vld [vmem:[%s4 + $0x84] sm:$0xf]
  %v421 = vld [vmem:[%s4 + $0x88] sm:$0xf]
  %v422 = vld [vmem:[%s4 + $0x8c] sm:$0xf]
  %v423 = vld [vmem:[%s4 + $0x90] sm:$0xf]
  %v424 = vld [vmem:[%s4 + $0x94] sm:$0xf]
  %v425 = vld [vmem:[%s4 + $0x98] sm:$0xf]
  %v426 = vld [vmem:[%s4 + $0x9c] sm:$0xf]
  %v427 = vld [vmem:[%s4 + $0xa0] sm:$0xf]
  %v428 = vld [vmem:[%s4 + $0xa4] sm:$0xf]
  %v429 = vld [vmem:[%s4 + $0xa8] sm:$0xf]
  %v430 = vld [vmem:[%s4 + $0xac] sm:$0xf]
  %v431 = vld [vmem:[%s4 + $0xb0] sm:$0xf]
  %v432 = vld [vmem:[%s4 + $0xb4] sm:$0xf]
  %v433 = vld [vmem:[%s4 + $0xb8] sm:$0xf]
  %v434 = vld [vmem:[%s4 + $0xbc] sm:$0xf]
  %v435 = vld [vmem:[%s5] sm:$0x1]
  %v437 = vperm.slane %v435, 0
  %v487 = vunpack.c.l.b16 %v387
  %v488 = vunpack.c.l.b16 %v388
  %v489 = vunpack.c.l.b16 %v389
  %v490 = vunpack.c.l.b16 %v390
  %v491 = vunpack.c.l.b16 %v391
  %v492 = vunpack.c.l.b16 %v392
  %v493 = vunpack.c.l.b16 %v393
  %v494 = vunpack.c.l.b16 %v394
  %v495 = vunpack.c.l.b16 %v395
  %v496 = vunpack.c.l.b16 %v396
  %v497 = vunpack.c.l.b16 %v397
  %v498 = vunpack.c.l.b16 %v398
  %v499 = vunpack.c.l.b16 %v399
  %v500 = vunpack.c.l.b16 %v400
  %v501 = vunpack.c.l.b16 %v401
  %v502 = vunpack.c.l.b16 %v402
  %v503 = vunpack.c.l.b16 %v403
  %v504 = vunpack.c.l.b16 %v404
  %v505 = vunpack.c.l.b16 %v405
  %v506 = vunpack.c.l.b16 %v406
  %v507 = vunpack.c.l.b16 %v407
  %v508 = vunpack.c.l.b16 %v408
  %v509 = vunpack.c.l.b16 %v409
  %v510 = vunpack.c.l.b16 %v410
  %v511 = vunpack.c.l.b16 %v411
  %v512 = vunpack.c.l.b16 %v412
  %v513 = vunpack.c.l.b16 %v413
  %v514 = vunpack.c.l.b16 %v414
  %v515 = vunpack.c.l.b16 %v415
  %v516 = vunpack.c.l.b16 %v416
  %v517 = vunpack.c.l.b16 %v417
  %v518 = vunpack.c.l.b16 %v418
  %v519 = vunpack.c.l.b16 %v419
  %v520 = vunpack.c.l.b16 %v420
  %v521 = vunpack.c.l.b16 %v421
  %v522 = vunpack.c.l.b16 %v422
  %v523 = vunpack.c.l.b16 %v423
  %v524 = vunpack.c.l.b16 %v424
  %v525 = vunpack.c.l.b16 %v425
  %v526 = vunpack.c.l.b16 %v426
  %v527 = vunpack.c.l.b16 %v427
  %v528 = vunpack.c.l.b16 %v428
  %v529 = vunpack.c.l.b16 %v429
  %v530 = vunpack.c.l.b16 %v430
  %v531 = vunpack.c.l.b16 %v431
  %v532 = vunpack.c.l.b16 %v432
  %v533 = vunpack.c.l.b16 %v433
  %v534 = vunpack.c.l.b16 %v434
  %v535 = vpack.c.b16 %v488, %v487
  %v536 = vpack.c.b16 %v490, %v489
  %v537 = vpack.c.b16 %v492, %v491
  %v538 = vpack.c.b16 %v494, %v493
  %v539 = vpack.c.b16 %v496, %v495
  %v540 = vpack.c.b16 %v498, %v497
  %v541 = vpack.c.b16 %v500, %v499
  %v542 = vpack.c.b16 %v502, %v501
  %v543 = vpack.c.b16 %v504, %v503
  %v544 = vpack.c.b16 %v506, %v505
  %v545 = vpack.c.b16 %v508, %v507
  %v546 = vpack.c.b16 %v510, %v509
  %v547 = vpack.c.b16 %v512, %v511
  %v548 = vpack.c.b16 %v514, %v513
  %v549 = vpack.c.b16 %v516, %v515
  %v550 = vpack.c.b16 %v518, %v517
  %v551 = vpack.c.b16 %v520, %v519
  %v552 = vpack.c.b16 %v522, %v521
  %v553 = vpack.c.b16 %v524, %v523
  %v554 = vpack.c.b16 %v526, %v525
  %v555 = vpack.c.b16 %v528, %v527
  %v556 = vpack.c.b16 %v530, %v529
  %v557 = vpack.c.b16 %v532, %v531
  %v558 = vpack.c.b16 %v534, %v533
  %583 = vmatpush.bf16.msra.mxu0 %v542
  %584 = vmatpush.bf16.msra.mxu0 %v541
  %585 = vmatpush.bf16.msra.mxu0 %v540
  %586 = vmatpush.bf16.msra.mxu0 %v539
  %587 = vmatpush.bf16.msra.mxu0 %v538
  %588 = vmatpush.bf16.msra.mxu0 %v537
  %589 = vmatpush.bf16.msra.mxu0 %v536
  %590 = vmatpush.bf16.msra.mxu0 %v535
  %591 = vmatmul.bf16.gmra.mxu0 %v377
  %v592 = vpop.f32.mrf.mxu0
  %v593 = vadd.f32 %v437, %v592
  %v594 = vpop.f32.mrf.mxu0
  %v595 = vadd.f32 %v437, %v594
  %596 = vmatmul.bf16.gmra.mxu0 %v369
  %v597 = vpop.f32.mrf.mxu0
  %v598 = vadd.f32 %v437, %v597
  %v599 = vpop.f32.mrf.mxu0
  %v600 = vadd.f32 %v437, %v599
  %601 = vdwg.mxu0
  %602 = vmatpush.bf16.msra.mxu0 %v550
  %603 = vmatpush.bf16.msra.mxu0 %v549
  %604 = vmatpush.bf16.msra.mxu0 %v548
  %605 = vmatpush.bf16.msra.mxu0 %v547
  %606 = vmatpush.bf16.msra.mxu0 %v546
  %607 = vmatpush.bf16.msra.mxu0 %v545
  %608 = vmatpush.bf16.msra.mxu0 %v544
  %609 = vmatpush.bf16.msra.mxu0 %v543
  %610 = vmatmul.bf16.gmra.mxu0 %v381
  %v611 = vpop.f32.mrf.mxu0
  %v612 = vadd.f32 %v593, %v611
  %v613 = vpop.f32.mrf.mxu0
  %v614 = vadd.f32 %v595, %v613
  %615 = vmatmul.bf16.gmra.mxu0 %v370
  %v616 = vpop.f32.mrf.mxu0
  %v617 = vadd.f32 %v598, %v616
  %v618 = vpop.f32.mrf.mxu0
  %v619 = vadd.f32 %v600, %v618
  %620 = vdwg.mxu0
  %621 = vmatpush.bf16.msra.mxu0 %v558
  %622 = vmatpush.bf16.msra.mxu0 %v557
  %623 = vmatpush.bf16.msra.mxu0 %v556
  %624 = vmatpush.bf16.msra.mxu0 %v555
  %625 = vmatpush.bf16.msra.mxu0 %v554
  %626 = vmatpush.bf16.msra.mxu0 %v553
  %627 = vmatpush.bf16.msra.mxu0 %v552
  %628 = vmatpush.bf16.msra.mxu0 %v551
  %629 = vmatmul.bf16.gmra.mxu0 %v385
  %v630 = vpop.f32.mrf.mxu0
  %v631 = vadd.f32 %v612, %v630
  %v632 = vpop.f32.mrf.mxu0
  %v633 = vadd.f32 %v614, %v632
  %634 = vmatmul.bf16.gmra.mxu0 %v371
  %v635 = vpop.f32.mrf.mxu0
  %v636 = vadd.f32 %v617, %v635
  %v637 = vpop.f32.mrf.mxu0
  %v638 = vadd.f32 %v619, %v637
  %639 = vdwg.mxu0
  %v640 = vmax.f32 %v631, 0.0
  %v641 = vmax.f32 %v633, 0.0
  %v642 = vmax.f32 %v636, 0.0
  %v643 = vmax.f32 %v638, 0.0
  %644 = vst [vmem:[%s8] sm:$0xff] %v640
  %645 = vst [vmem:[%s8 + $0x8] sm:$0xff] %v641
  %646 = vst [vmem:[%s8 + $0x10] sm:$0xff] %v642
  %647 = vst [vmem:[%s8 + $0x18] sm:$0xf] %v643
  // Predicated region
  $region34: #{convblock_forward.1} parent=0 // pred_check
    _
  $region35: #{convblock_forward.1} parent=0 // pred_check_branch
    %649 = sbr.rel (0) target = $region37
  $region36: #{convblock_forward.1} parent=0 // pred_region
    _
  $region37: #{convblock_forward.1} parent=0 // pred_fallthru
    _
  // Predicated region
  $region38: #{convblock_forward.1} parent=0 // pred_check
    _
  $region39: #{convblock_forward.1} parent=0 // pred_check_branch
    %651 = sbr.rel (0) target = $region41
  $region40: #{convblock_forward.1} parent=0 // pred_region
    _
  $region41: #{convblock_forward.1} parent=0 // pred_fallthru
    _

</llo_original>
